<compile_context>
chip_gen: v7x
topology: tpu7x:2x2x1
jax: 0.10.0
libtpu: 0.0.40
codegen_flags: <defaults>
</compile_context>

<pallas_src>
import functools

import jax
import jax.numpy as jnp
from jax.experimental import pallas as pl
from jax.experimental.pallas import tpu as pltpu


def _round_up(x, m):
    return ((x + m - 1) // m) * m


def _vmem_capacity_bytes(default=64 * 1024 * 1024):
    """Per-core physical VMEM; conservative fallback if the query fails."""
    try:
        info = pltpu.get_tpu_info()
        cap = getattr(info, "vmem_capacity_bytes", None)
        if cap:
            return int(cap)
    except Exception:
        pass
    return default


# ----------------------------------------------------------------------------
# Pallas kernel: metric tile (bn, t, c) -> drop token_position, split even/odd
# halves (one-hot MXU row-select), rsqrt-normalize, cosine scores a @ b^T
# (contraction on last dims), row-wise max / first-occurrence argmax.
# ----------------------------------------------------------------------------
def _score_max_kernel(m_ref, max_ref, idx_ref, *, token_position):
    bn, t, c = m_ref.shape
    ta = t // 2          # tokens in the "even" half (a)
    tb = (t - 1) // 2    # tokens in the "odd"  half (b)

    m = m_ref[...].astype(jnp.float32)                        # (bn, t, c)

    def _one_hot_rows(rows, parity):
        # Output row p selects original token index  j = 2p + parity, shifted
        # by +1 once it reaches token_position (the dropped token).  Built from
        # iota/compare only (no gather); exact 0/1 values, zero in lane padding.
        p = jax.lax.broadcasted_iota(jnp.int32, (bn, rows, t), 1)
        j = jax.lax.broadcasted_iota(jnp.int32, (bn, rows, t), 2)
        src = 2 * p + parity
        src = jnp.where(src >= token_position, src + 1, src)
        return jnp.where(j == src, jnp.float32(1.0), jnp.float32(0.0))

    sel_a = _one_hot_rows(ta, 0)                               # (bn, ta, t)
    sel_b = _one_hot_rows(tb, 1)                               # (bn, tb, t)

    # Row gather as a 0/1 matmul on the MXU (exact row copies): the metric's
    # only HBM read stays inside this kernel.
    a = jnp.einsum("npt,ntc->npc", sel_a, m, preferred_element_type=jnp.float32)
    b = jnp.einsum("nkt,ntc->nkc", sel_b, m, preferred_element_type=jnp.float32)

    # metric / metric.norm(dim=-1, keepdim=True): rsqrt -> one EUP push.
    # No eps, matching torch's bare division (zero rows -> NaN, as in torch).
    a = a * jax.lax.rsqrt(jnp.sum(a * a, axis=-1, keepdims=True))
    b = b * jax.lax.rsqrt(jnp.sum(b * b, axis=-1, keepdims=True))

    # scores = a @ b^T — contract on the last dims so the MXU consumes the
    # transposed RHS directly (no XLU transpose); f32 keeps argmax ties exact.
    scores = jnp.einsum("npc,nkc->npk", a, b, preferred_element_type=jnp.float32)

    # node_max, node_idx = scores.max(dim=-1)   (first occurrence on ties)
    node_max = jnp.max(scores, axis=-1)
    lane = jax.lax.broadcasted_iota(jnp.int32, scores.shape, 2)
    node_idx = jnp.min(
        jnp.where(scores == node_max[..., None], lane, jnp.int32(2 ** 30)),
        axis=-1,
    )

    max_ref[...] = node_max
    idx_ref[...] = node_idx.astype(jnp.int32)


def cosine_pair_scores_pallas(metric, token_position):
    """metric (n, t, c) -> (node_max (n, t//2) f32, node_idx (n, t//2) i32).

    Equivalent to: drop token_position, L2-normalize rows, a,b = even/odd
    halves, scores = a @ b^T, scores.max(dim=-1).
    """
    n, t, c = metric.shape
    ta, tb = t // 2, (t - 1) // 2

    itemsize = jnp.dtype(metric.dtype).itemsize
    sub_in = {4: 8, 2: 16, 1: 32}.get(itemsize, 8)
    c_r = _round_up(c, 128)
    t_r = _round_up(t, 128)
    tb_r = _round_up(tb, 128)
    ta_r = _round_up(ta, 128)
    t8, ta8, tb8 = _round_up(t, 8), _round_up(ta, 8), _round_up(tb, 8)

    # Live-VMEM bytes per batch element, counting (sublane, lane) = (8, 128)
    # padding of every tile / temporary (conservative).
    per_elem = (
        2 * _round_up(t, sub_in) * c_r * itemsize   # double-buffered metric tile
        + t8 * c_r * 4                              # f32 copy of the tile
        + 2 * (ta8 + tb8) * t_r * 4                 # one-hot selectors + iota temps
        + 2 * (ta8 + tb8) * c_r * 4                 # a / b + normalized copies
        + 2 * ta8 * tb_r * 4                        # scores + argmax mask temp
        + 4 * ta_r * 4                              # (bn, ta) outputs, 2 bufs each
    )

    # Per-chip sizing: ~96 MiB scoped limit on 128 MiB parts (v5e/v6e),
    # ~48 MiB on 64 MiB-per-TC parts (v7x); ~1/3 of it as the live-tile budget.
    vmem_cap = _vmem_capacity_bytes()
    vmem_limit = int(min((vmem_cap * 3) // 4, 96 * 1024 * 1024))
    budget = vmem_limit // 3

    bn = max(1, budget // per_elem)
    if n >= 16:
        # Keep >= 2 grid steps so the "parallel" axis can shard across both
        # TensorCores on dual-TC (v7x) parts.
        bn = min(bn, max(8, ((n // 2) // 8) * 8))
    # TODO(synk): for tiny n on v7x a second "parallel" axis tiling ta would
    # keep both TensorCores busy; not needed at these sizes.

    if bn >= n:
        bn, n_pad, m = n, n, metric
    else:
        bn = max(8, (bn // 8) * 8)                  # output sublane alignment
        n_pad = _round_up(n, bn)
        m = metric if n_pad == n else jnp.pad(
            metric, ((0, n_pad - n), (0, 0), (0, 0)))

    kernel = functools.partial(_score_max_kernel,
                               token_position=int(token_position))

    node_max, node_idx = pl.pallas_call(
        kernel,
        out_shape=(
            jax.ShapeDtypeStruct((n_pad, ta), jnp.float32),
            jax.ShapeDtypeStruct((n_pad, ta), jnp.int32),
        ),
        grid=(n_pad // bn,),
        in_specs=[pl.BlockSpec((bn, t, c), lambda i: (i, 0, 0))],
        out_specs=(
            pl.BlockSpec((bn, ta), lambda i: (i, 0)),
            pl.BlockSpec((bn, ta), lambda i: (i, 0)),
        ),
        compiler_params=pltpu.CompilerParams(
            dimension_semantics=("parallel",),
            vmem_limit_bytes=vmem_limit,
        ),
    )(m)

    return node_max[:n], node_idx[:n]


# ----------------------------------------------------------------------------
# RMeeTo_Merge.forward equivalent
# ----------------------------------------------------------------------------
def rmeeto_merge_forward(
    metric,
    token_position,
    *,
    class_token=False,
    num_prune=5,
    if_prune=False,
    if_order=True,
    distance="cosine",
    merge_mode="sum",
    choose="max",
):
    """Returns a merge callable, matching RMeeTo_Merge.forward (module defaults)."""
    # TODO(synk): 'l1'/'l2' distances and '3c/5c/...' choose modes are not
    # implemented in the Pallas path (module defaults are cosine / max).
    assert distance == "cosine" and choose == "max"
    del merge_mode  # used only by merge_wavg, mirrored below

    n, t, c = metric.shape
    protected = 1 if class_token else 0
    r = min(num_prune, (t - protected) // 2)

    def do_nothing(x, mode=None):
        return x, token_position

    if r <= 0:
        return do_nothing

    # ---- Pallas hot path: in-kernel split + normalize + cosine + max/argmax --
    node_max, node_idx = cosine_pair_scores_pallas(metric, token_position)

    # Data-dependent bookkeeping in plain JAX (same semantics as torch).
    edge_idx = jnp.argsort(-node_max, axis=-1)                  # descending
    unm_idx = edge_idx[:, r:]                                   # (n, ta - r)
    src_idx = edge_idx[:, :r]                                   # (n, r)
    dst_idx = jnp.take_along_axis(node_idx, src_idx, axis=-1)   # (n, r)

    def _scatter_reduce(dst, idx, src, mode):
        # torch.Tensor.scatter_reduce(dim=-2, include_self=True)
        if mode == "sum":
            return jax.vmap(lambda d, i, s: d.at[i].add(s))(dst, idx, src)
        if mode == "mean":
            def one(d, i, s):
                summed = d.at[i].add(s)
                counts = jnp.zeros((d.shape[0], 1), d.dtype).at[i].add(1)
                return summed / (1 + counts)
            return jax.vmap(one)(dst, idx, src)
        if mode == "amax":
            return jax.vmap(lambda d, i, s: d.at[i].max(s))(dst, idx, src)
        raise ValueError(f"unsupported reduce mode: {mode}")

    def merge(x, mode="mean"):
        cls_token = x[:, token_position, :]
        xr = jnp.concatenate(
            [x[:, :token_position, :], x[:, token_position + 1:, :]], axis=1)
        src, dst = xr[:, ::2, :], xr[:, 1::2, :]
        t1 = src.shape[1]
        unm = jnp.take_along_axis(src, unm_idx[:, :, None], axis=1)
        src_g = jnp.take_along_axis(src, src_idx[:, :, None], axis=1)
        if not if_prune:
            dst = _scatter_reduce(dst, dst_idx, src_g, mode)
        # NOTE: torch's merge() uses t1 here while ordered_merge() uses t;
        # mirrored faithfully.
        new_token_position = int(token_position * (t1 - r) // t1)
        unm = jnp.concatenate(
            [unm[:, :new_token_position], cls_token[:, None, :],
             unm[:, new_token_position:]], axis=1)
        return jnp.concatenate([unm, dst], axis=1), new_token_position

    def ordered_merge(x, mode="mean"):
        n_, t_, c_ = x.shape
        cls_token = x[:, token_position, :]
        xr = jnp.concatenate(
            [x[:, :token_position, :], x[:, token_position + 1:, :]], axis=1)
        src, dst = xr[:, ::2, :], xr[:, 1::2, :]
        idx_origin = jnp.broadcast_to(
            jnp.arange(t_ - 1, dtype=jnp.int32)[None, :, None], (n_, t_ - 1, 1))
        src_idx_original = idx_origin[:, ::2, :]
        dst_idx_original = idx_origin[:, 1::2, :]

        unm = jnp.take_along_axis(src, unm_idx[:, :, None], axis=1)
        src_g = jnp.take_along_axis(src, src_idx[:, :, None], axis=1)
        src_io = jnp.take_along_axis(src_idx_original, unm_idx[:, :, None], axis=1)
        if not if_prune:
            dst = _scatter_reduce(dst, dst_idx, src_g, mode)

        original_idx = jnp.concatenate([src_io, dst_idx_original], axis=1)
        order = jnp.argsort(original_idx[..., 0], axis=1)
        seq = jnp.concatenate([unm, dst], axis=1)
        seq = jnp.take_along_axis(seq, order[:, :, None], axis=1)

        new_token_position = int(token_position * (t_ - r) // t_)
        seq = jnp.concatenate(
            [seq[:, :new_token_position], cls_token[:, None, :],
             seq[:, new_token_position:]], axis=1)
        return seq, new_token_position

    return ordered_merge if if_order else merge


def merge_wavg(merge_fn, x, size=None, merge_mode="sum"):
    """Weighted-average merge, mirroring RMeeTo_Merge.merge_wavg."""
    if size is None:
        size = jnp.ones_like(x[..., 0:1])
    xm, token_position = merge_fn(x * size, mode=merge_mode)
    size_m, _ = merge_fn(size, mode=merge_mode)
    xm = xm / size_m
    return xm, size_m, token_position


def merge_source(merge_fn, x, source=None):
    """Source tracking, mirroring RMeeTo_Merge.merge_source."""
    if source is None:
        n_, t_, _ = x.shape
        source = jnp.broadcast_to(jnp.eye(t_, dtype=x.dtype)[None], (n_, t_, t_))
    source, _ = merge_fn(source, mode="amax")
    return source


# ----------------------------------------------------------------------------
if __name__ == "__main__":
    key = jax.random.PRNGKey(0)
    k1, k2 = jax.random.split(key)

    n, t, c = 2, 17, 32           # batch, tokens, channels
    token_position = 3
    num_prune = 5

    metric = jax.random.normal(k1, (n, t, c), dtype=jnp.float32)
    x = jax.random.normal(k2, (n, t, c), dtype=jnp.float32)

    # --- kernel sanity check vs a pure-JAX reference ---
    nm, ni = cosine_pair_scores_pallas(metric, token_position)
    nm = jax.block_until_ready(nm)

    keep = [i for i in range(t) if i != token_position]
    a_chk = metric[:, jnp.asarray(keep[0::2]), :]
    b_chk = metric[:, jnp.asarray(keep[1::2]), :]
    an = a_chk / jnp.linalg.norm(a_chk, axis=-1, keepdims=True)
    bn_ = b_chk / jnp.linalg.norm(b_chk, axis=-1, keepdims=True)
    ref_scores = jnp.einsum("nac,nbc->nab", an, bn_,
                            precision=jax.lax.Precision.HIGHEST)
    ref_max = ref_scores.max(axis=-1)
    ref_idx = jnp.argmax(ref_scores, axis=-1).astype(jnp.int32)
    assert nm.shape == (n, t // 2) and ni.dtype == jnp.int32
    assert jnp.allclose(nm, ref_max, atol=1e-3, rtol=1e-3)
    top2 = jnp.sort(ref_scores, axis=-1)[..., -2:]
    gap = top2[..., 1] - top2[..., 0]
    assert bool(jnp.all((ni == ref_idx) | (gap < 1e-4)))   # allow only true ties

    # forward(): builds the merge closure (Pallas kernel runs here)
    merge_fn = rmeeto_merge_forward(metric, token_position, num_prune=num_prune)

    # apply the (ordered, default) merge, merge_mode='sum'
    out, new_pos = merge_fn(x, mode="sum")
    out = jax.block_until_ready(out)

    # also exercise merge_wavg and merge_source
    xw, sizes, pos_w = merge_wavg(merge_fn, x)
    xw = jax.block_until_ready(xw)
    src_track = merge_source(merge_fn, x)

    r = min(num_prune, t // 2)
    assert out.shape == (n, t - r, c), out.shape
    assert xw.shape == (n, t - r, c), xw.shape
    assert src_track.shape == (n, t - r, t), src_track.shape
    assert new_pos == int(token_position * (t - r) // t)
    assert bool(jnp.isfinite(out).all()) and bool(jnp.isfinite(xw).all())

    print("KERNEL_OK")
</pallas_src>

<mosaic_0001>
module attributes {stable_mosaic.version = 11 : i64} {
  func.func @_score_max_kernel(%arg0: i32, %arg1: memref<2x17x32xf32, #tpu.memory_space<vmem>>, %arg2: memref<2x8xf32, #tpu.memory_space<vmem>>, %arg3: memref<2x8xi32, #tpu.memory_space<vmem>>) attributes {dimension_semantics = [#tpu.dimension_semantics<parallel>], iteration_bounds = array<i64: 1>, scalar_prefetch = 0 : i64, scratch_operands = 0 : i64, tpu.core_type = #tpu.core_type<tc>, window_params = [{transform_indices = @transform_0, window_bounds = array<i64: 2, 17, 32>}, {transform_indices = @transform_1, window_bounds = array<i64: 2, 8>}, {transform_indices = @transform_2, window_bounds = array<i64: 2, 8>}]} {
    %c0 = arith.constant 0 : index
    %c0_0 = arith.constant 0 : index
    %c0_1 = arith.constant 0 : index
    %0 = vector.load %arg1[%c0, %c0_0, %c0_1] : memref<2x17x32xf32, #tpu.memory_space<vmem>>, vector<2x17x32xf32>
    %1 = tpu.iota {dimensions = array<i32: 1>} : vector<2x8x17xi32>
    %2 = tpu.iota {dimensions = array<i32: 2>} : vector<2x8x17xi32>
    %c2_i32 = arith.constant 2 : i32
    %3 = vector.broadcast %c2_i32 : i32 to vector<2x8x17xi32>
    %4 = arith.muli %3, %1 : vector<2x8x17xi32>
    %c0_i32 = arith.constant 0 : i32
    %5 = vector.broadcast %c0_i32 : i32 to vector<2x8x17xi32>
    %6 = arith.addi %4, %5 : vector<2x8x17xi32>
    %c3_i32 = arith.constant 3 : i32
    %7 = vector.broadcast %c3_i32 : i32 to vector<2x8x17xi32>
    %8 = arith.cmpi sge, %6, %7 : vector<2x8x17xi32>
    %c1_i32 = arith.constant 1 : i32
    %9 = vector.broadcast %c1_i32 : i32 to vector<2x8x17xi32>
    %10 = arith.addi %6, %9 : vector<2x8x17xi32>
    %11 = arith.select %8, %10, %6 : vector<2x8x17xi1>, vector<2x8x17xi32>
    %12 = arith.cmpi eq, %2, %11 : vector<2x8x17xi32>
    %cst = arith.constant 1.000000e+00 : f32
    %cst_2 = arith.constant 0.000000e+00 : f32
    %13 = vector.broadcast %cst : f32 to vector<2x8x17xf32>
    %14 = vector.broadcast %cst_2 : f32 to vector<2x8x17xf32>
    %15 = arith.select %12, %13, %14 : vector<2x8x17xi1>, vector<2x8x17xf32>
    %16 = tpu.iota {dimensions = array<i32: 1>} : vector<2x8x17xi32>
    %17 = tpu.iota {dimensions = array<i32: 2>} : vector<2x8x17xi32>
    %c2_i32_3 = arith.constant 2 : i32
    %18 = vector.broadcast %c2_i32_3 : i32 to vector<2x8x17xi32>
    %19 = arith.muli %18, %16 : vector<2x8x17xi32>
    %c1_i32_4 = arith.constant 1 : i32
    %20 = vector.broadcast %c1_i32_4 : i32 to vector<2x8x17xi32>
    %21 = arith.addi %19, %20 : vector<2x8x17xi32>
    %c3_i32_5 = arith.constant 3 : i32
    %22 = vector.broadcast %c3_i32_5 : i32 to vector<2x8x17xi32>
    %23 = arith.cmpi sge, %21, %22 : vector<2x8x17xi32>
    %c1_i32_6 = arith.constant 1 : i32
    %24 = vector.broadcast %c1_i32_6 : i32 to vector<2x8x17xi32>
    %25 = arith.addi %21, %24 : vector<2x8x17xi32>
    %26 = arith.select %23, %25, %21 : vector<2x8x17xi1>, vector<2x8x17xi32>
    %27 = arith.cmpi eq, %17, %26 : vector<2x8x17xi32>
    %cst_7 = arith.constant 1.000000e+00 : f32
    %cst_8 = arith.constant 0.000000e+00 : f32
    %28 = vector.broadcast %cst_7 : f32 to vector<2x8x17xf32>
    %29 = vector.broadcast %cst_8 : f32 to vector<2x8x17xf32>
    %30 = arith.select %27, %28, %29 : vector<2x8x17xi1>, vector<2x8x17xf32>
    "tpu.trace_start"() <{level = 10 : i32, message = "npt,ntc->npc"}> : () -> ()
    %cst_9 = arith.constant dense<0.000000e+00> : vector<2x8x32xf32>
    %31 = tpu.matmul %15, %0, %cst_9 {dimension_numbers = #tpu.dot_dimension_numbers<[2], [1], [1], [2], [0, 0, 0, 1, 1, 2], [0], [0]>} : vector<2x8x17xf32>, vector<2x17x32xf32>, vector<2x8x32xf32> -> vector<2x8x32xf32>
    "tpu.trace_stop"() : () -> ()
    "tpu.trace_start"() <{level = 10 : i32, message = "nkt,ntc->nkc"}> : () -> ()
    %cst_10 = arith.constant dense<0.000000e+00> : vector<2x8x32xf32>
    %32 = tpu.matmul %30, %0, %cst_10 {dimension_numbers = #tpu.dot_dimension_numbers<[2], [1], [1], [2], [0, 0, 0, 1, 1, 2], [0], [0]>} : vector<2x8x17xf32>, vector<2x17x32xf32>, vector<2x8x32xf32> -> vector<2x8x32xf32>
    "tpu.trace_stop"() : () -> ()
    %33 = arith.mulf %31, %31 : vector<2x8x32xf32>
    %cst_11 = arith.constant dense<0.000000e+00> : vector<2x8xf32>
    %34 = vector.multi_reduction <add>, %33, %cst_11 [2] : vector<2x8x32xf32> to vector<2x8xf32>
    %35 = vector.shape_cast %34 : vector<2x8xf32> to vector<2x8x1xf32>
    %36 = math.rsqrt %35 : vector<2x8x1xf32>
    %37 = vector.broadcast %36 : vector<2x8x1xf32> to vector<2x8x32xf32>
    %38 = arith.mulf %31, %37 : vector<2x8x32xf32>
    %39 = arith.mulf %32, %32 : vector<2x8x32xf32>
    %cst_12 = arith.constant dense<0.000000e+00> : vector<2x8xf32>
    %40 = vector.multi_reduction <add>, %39, %cst_12 [2] : vector<2x8x32xf32> to vector<2x8xf32>
    %41 = vector.shape_cast %40 : vector<2x8xf32> to vector<2x8x1xf32>
    %42 = math.rsqrt %41 : vector<2x8x1xf32>
    %43 = vector.broadcast %42 : vector<2x8x1xf32> to vector<2x8x32xf32>
    %44 = arith.mulf %32, %43 : vector<2x8x32xf32>
    "tpu.trace_start"() <{level = 10 : i32, message = "npc,nkc->npk"}> : () -> ()
    %cst_13 = arith.constant dense<0.000000e+00> : vector<2x8x8xf32>
    %45 = tpu.matmul %38, %44, %cst_13 {dimension_numbers = #tpu.dot_dimension_numbers<[2], [2], [1], [1], [0, 0, 0, 1, 1, 1], [0], [0]>} : vector<2x8x32xf32>, vector<2x8x32xf32>, vector<2x8x8xf32> -> vector<2x8x8xf32>
    "tpu.trace_stop"() : () -> ()
    %cst_14 = arith.constant dense<0xFF800000> : vector<2x8xf32>
    %46 = vector.multi_reduction <maximumf>, %45, %cst_14 [2] : vector<2x8x8xf32> to vector<2x8xf32>
    %47 = tpu.iota {dimensions = array<i32: 2>} : vector<2x8x8xi32>
    %48 = vector.shape_cast %46 : vector<2x8xf32> to vector<2x8x1xf32>
    %49 = vector.broadcast %48 : vector<2x8x1xf32> to vector<2x8x8xf32>
    %50 = arith.cmpf oeq, %45, %49 : vector<2x8x8xf32>
    %c1073741824_i32 = arith.constant 1073741824 : i32
    %51 = vector.broadcast %c1073741824_i32 : i32 to vector<2x8x8xi32>
    %52 = arith.select %50, %47, %51 : vector<2x8x8xi1>, vector<2x8x8xi32>
    %cst_15 = arith.constant dense<2147483647> : vector<2x8xi32>
    %53 = vector.multi_reduction <minsi>, %52, %cst_15 [2] : vector<2x8x8xi32> to vector<2x8xi32>
    %c0_16 = arith.constant 0 : index
    %c0_17 = arith.constant 0 : index
    %54 = vector.load %arg2[%c0_16, %c0_17] : memref<2x8xf32, #tpu.memory_space<vmem>>, vector<2x8xf32>
    tpu.vector_store %arg2[%c0_16, %c0_17], %46 {strides = array<i32>} : memref<2x8xf32, #tpu.memory_space<vmem>>, vector<2x8xf32>,
    %c0_18 = arith.constant 0 : index
    %c0_19 = arith.constant 0 : index
    %55 = vector.load %arg3[%c0_18, %c0_19] : memref<2x8xi32, #tpu.memory_space<vmem>>, vector<2x8xi32>
    tpu.vector_store %arg3[%c0_18, %c0_19], %53 {strides = array<i32>} : memref<2x8xi32, #tpu.memory_space<vmem>>, vector<2x8xi32>,
    return
  }
  func.func @transform_0(%arg0: i32) -> (i32, i32, i32) {
    %c0_i32 = arith.constant 0 : i32
    %c0_i32_0 = arith.constant 0 : i32
    %c0_i32_1 = arith.constant 0 : i32
    return %arg0, %c0_i32, %c0_i32_0 : i32, i32, i32
  }
  func.func @transform_1(%arg0: i32) -> (i32, i32) {
    %c0_i32 = arith.constant 0 : i32
    %c0_i32_0 = arith.constant 0 : i32
    return %arg0, %c0_i32 : i32, i32
  }
  func.func @transform_2(%arg0: i32) -> (i32, i32) {
    %c0_i32 = arith.constant 0 : i32
    %c0_i32_0 = arith.constant 0 : i32
    return %arg0, %c0_i32 : i32, i32
  }
}

</mosaic_0001>

<llo_original>
// kernel: tpu_custom_call.1
$region0: #{tpu_custom_call.1}
  #allocation0 [shape = 'u32[]', space=smem, size = 0x4, offset = 0x4, fixed_abs, tag = 'smem constant byte address 0x4 - core index']
  #allocation1 [shape = 'u32[144,128]{1,0:T(1,128)}', space=vmem, size = 0x12000, scoped, tag = 'internal scratch']
  %s0 = inlined_call_operand.vmem [shape: f32[2,17,32], index: 0, kind: input, shape index: {}]
  %s1 = inlined_call_operand.hbm [shape: f32[2,8], index: 1, kind: output, shape index: {0}]
  %s2 = inlined_call_operand.hbm [shape: s32[2,8], index: 2, kind: output, shape index: {1}]
  %3 = xla_tuple %s1, %s2
  %s4 = sld [smem:[#allocation0]]
  $region22: #{tpu_custom_call.1} parent=0
    _
  %s6 = ssub.s32 1, %s4
  %s7 = scalar_select 0, %s6, %s4
  $region1: #{tpu_custom_call.1} parent=0
    #allocation2 [shape = 'u8[1024]{0}', space=vmem, size = 0x400, scoped, tag = 'output window, operand 0, single buffered']
    #allocation3 [shape = 's32[1]{0}', space=sflag, size = 0x4, scoped, tag = 'scoped memory for tpu_custom_call.1']
    #allocation4 [shape = 'u8[1024]{0}', space=vmem, size = 0x400, scoped, tag = 'output window, operand 1, single buffered']
    #allocation5 [shape = 's32[1]{0}', space=sflag, size = 0x4, scoped, tag = 'scoped memory for tpu_custom_call.1']
    %8 = vsyncpa [#allocation3], 0
    %9 = vsyncpa [#allocation5], 0
    // Predicated region
    $region2: #{tpu_custom_call.1} parent=1 // pred_check
      _
    $region3: #{tpu_custom_call.1} parent=1 // pred_check_branch
      %11 = sbr.rel (0) target = $region5
    $region4: #{tpu_custom_call.1} parent=1 // pred_region
      _
    $region5: #{tpu_custom_call.1} parent=1 // pred_fallthru
      _
    %v12 = vld [vmem:[%s0] sm:$0xff]
    %v13 = vld [vmem:[%s0 + $0x8] sm:$0xff]
    %v14 = vld [vmem:[%s0 + $0x10] sm:$0x1]
    %v15 = vld [vmem:[%s0 + $0x18] sm:$0xff]
    %v16 = vld [vmem:[%s0 + $0x20] sm:$0xff]
    %v17 = vld [vmem:[%s0 + $0x28] sm:$0x1]
    %v18 = vlaneseq
    %v19 = vshrl.u32 %v18, 7
    %v20 = vlaneseq
    %v21 = vand.u32 %v20, 127
    %v22 = vmul.u32 %v19, 2
    %vm23 = vcmp.ge.s32.totalorder %v22, 3
    %v24 = vadd.s32 %v22, 1
    %v25 = vsel %vm23, %v24, %v22
    %vm26 = vcmp.eq.s32.totalorder %v21, %v25
    %v27 = vsel %vm26, 1.0, 0.0
    %vm28 = vcmp.ge.s32.totalorder %v24, 3
    %v29 = vadd.s32 %v24, 1
    %v30 = vsel %vm28, %v29, %v24
    %vm31 = vcmp.eq.s32.totalorder %v21, %v30
    %v32 = vsel %vm31, 1.0, 0.0
    %vm33 = vcmask 138240
    %v35 = vsel %vm33, %v27, 0
    %vm37 = vcmask 1040384
    %v39 = vsel %vm37, %v14, 0
    %41 = vmatprep.subr.mxu0 0.0
    %42 = vmatpush1.msra.mxu0 %v12
    %43 = vmatprep.subr.mxu0 0.0
    %44 = vmatpush1.msra.mxu0 %v13
    %45 = vmatprep.subr.mxu0 0.0
    %46 = vmatpush1.msra.mxu0 %v39
    %47 = vmatprep.subr.mxu0 0.0
    %48 = vmatpush1.msra.mxu0 0.0
    %49 = vmatprep.subr.mxu0 0.0
    %50 = vmatpush1.msra.mxu0 0.0
    %51 = vmatprep.subr.mxu0 0.0
    %52 = vmatpush1.msra.mxu0 0.0
    %53 = vmatprep.subr.mxu0 0.0
    %54 = vmatpush1.msra.mxu0 0.0
    %55 = vmatprep.subr.mxu0 0.0
    %56 = vmatpush1.msra.mxu0 0.0
    %57 = vmatprep.subr.mxu0 0.0
    %58 = vmatpush1.msra.mxu0 0.0
    %59 = vmatprep.subr.mxu0 0.0
    %60 = vmatpush1.msra.mxu0 0.0
    %61 = vmatprep.subr.mxu0 0.0
    %62 = vmatpush1.msra.mxu0 0.0
    %63 = vmatprep.subr.mxu0 0.0
    %64 = vmatpush1.msra.mxu0 0.0
    %65 = vmatprep.subr.mxu0 0.0
    %66 = vmatpush1.msra.mxu0 0.0
    %67 = vmatprep.subr.mxu0 0.0
    %68 = vmatpush1.msra.mxu0 0.0
    %69 = vmatprep.subr.mxu0 0.0
    %70 = vmatpush1.msra.mxu0 0.0
    %71 = vmatprep.subr.mxu0 0.0
    %72 = vmatpush1.msra.mxu0 0.0
    %73 = vmatprep.subr.mxu0 0.0
    %74 = vmatpush1.msra.mxu0 0.0
    %75 = vmatprep.subr.mxu0 0.0
    %76 = vmatpush1.msra.mxu0 0.0
    %77 = vmatprep.subr.mxu0 0.0
    %78 = vmatpush1.msra.mxu0 0.0
    %79 = vmatprep.subr.mxu0 0.0
    %80 = vmatpush1.msra.mxu0 0.0
    %81 = vmatprep.subr.mxu0 0.0
    %82 = vmatpush1.msra.mxu0 0.0
    %83 = vmatprep.subr.mxu0 0.0
    %84 = vmatpush1.msra.mxu0 0.0
    %85 = vmatprep.subr.mxu0 0.0
    %86 = vmatpush1.msra.mxu0 0.0
    %87 = vmatprep.subr.mxu0 0.0
    %88 = vmatpush1.msra.mxu0 0.0
    %89 = vmatprep.subr.mxu0 0.0
    %90 = vmatpush1.msra.mxu0 0.0
    %91 = vmatprep.subr.mxu0 0.0
    %92 = vmatpush1.msra.mxu0 0.0
    %93 = vmatprep.subr.mxu0 0.0
    %94 = vmatpush1.msra.mxu0 0.0
    %95 = vmatprep.subr.mxu0 0.0
    %96 = vmatpush1.msra.mxu0 0.0
    %97 = vmatprep.subr.mxu0 0.0
    %98 = vmatpush1.msra.mxu0 0.0
    %99 = vmatprep.subr.mxu0 0.0
    %100 = vmatpush1.msra.mxu0 0.0
    %101 = vmatprep.subr.mxu0 0.0
    %102 = vmatpush1.msra.mxu0 0.0
    %103 = vmatprep.subr.mxu0 0.0
    %104 = vmatpush1.msra.mxu0 0.0
    %105 = vmatprep.mubr.f32.mxu0 0.0
    %106 = vmatmul.mubr.f32.gmra.mrb[0].mxu0 %v35
    %v107 = vpop.f32.mrb[0].mxu0
    %v108 = vadd.f32 0.0, %v107
    %v109 = vpop.f32.mrb[0].mxu0
    %110 = vdwg.mxu0
    %v112 = vsel %vm37, %v17, 0
    %114 = vmatprep.subr.mxu0 0.0
    %115 = vmatpush1.msra.mxu0 %v15
    %116 = vmatprep.subr.mxu0 0.0
    %117 = vmatpush1.msra.mxu0 %v16
    %118 = vmatprep.subr.mxu0 0.0
    %119 = vmatpush1.msra.mxu0 %v112
    %120 = vmatprep.subr.mxu0 0.0
    %121 = vmatpush1.msra.mxu0 0.0
    %122 = vmatprep.subr.mxu0 0.0
    %123 = vmatpush1.msra.mxu0 0.0
    %124 = vmatprep.subr.mxu0 0.0
    %125 = vmatpush1.msra.mxu0 0.0
    %126 = vmatprep.subr.mxu0 0.0
    %127 = vmatpush1.msra.mxu0 0.0
    %128 = vmatprep.subr.mxu0 0.0
    %129 = vmatpush1.msra.mxu0 0.0
    %130 = vmatprep.subr.mxu0 0.0
    %131 = vmatpush1.msra.mxu0 0.0
    %132 = vmatprep.subr.mxu0 0.0
    %133 = vmatpush1.msra.mxu0 0.0
    %134 = vmatprep.subr.mxu0 0.0
    %135 = vmatpush1.msra.mxu0 0.0
    %136 = vmatprep.subr.mxu0 0.0
    %137 = vmatpush1.msra.mxu0 0.0
    %138 = vmatprep.subr.mxu0 0.0
    %139 = vmatpush1.msra.mxu0 0.0
    %140 = vmatprep.subr.mxu0 0.0
    %141 = vmatpush1.msra.mxu0 0.0
    %142 = vmatprep.subr.mxu0 0.0
    %143 = vmatpush1.msra.mxu0 0.0
    %144 = vmatprep.subr.mxu0 0.0
    %145 = vmatpush1.msra.mxu0 0.0
    %146 = vmatprep.subr.mxu0 0.0
    %147 = vmatpush1.msra.mxu0 0.0
    %148 = vmatprep.subr.mxu0 0.0
    %149 = vmatpush1.msra.mxu0 0.0
    %150 = vmatprep.subr.mxu0 0.0
    %151 = vmatpush1.msra.mxu0 0.0
    %152 = vmatprep.subr.mxu0 0.0
    %153 = vmatpush1.msra.mxu0 0.0
    %154 = vmatprep.subr.mxu0 0.0
    %155 = vmatpush1.msra.mxu0 0.0
    %156 = vmatprep.subr.mxu0 0.0
    %157 = vmatpush1.msra.mxu0 0.0
    %158 = vmatprep.subr.mxu0 0.0
    %159 = vmatpush1.msra.mxu0 0.0
    %160 = vmatprep.subr.mxu0 0.0
    %161 = vmatpush1.msra.mxu0 0.0
    %162 = vmatprep.subr.mxu0 0.0
    %163 = vmatpush1.msra.mxu0 0.0
    %164 = vmatprep.subr.mxu0 0.0
    %165 = vmatpush1.msra.mxu0 0.0
    %166 = vmatprep.subr.mxu0 0.0
    %167 = vmatpush1.msra.mxu0 0.0
    %168 = vmatprep.subr.mxu0 0.0
    %169 = vmatpush1.msra.mxu0 0.0
    %170 = vmatprep.subr.mxu0 0.0
    %171 = vmatpush1.msra.mxu0 0.0
    %172 = vmatprep.subr.mxu0 0.0
    %173 = vmatpush1.msra.mxu0 0.0
    %174 = vmatprep.subr.mxu0 0.0
    %175 = vmatpush1.msra.mxu0 0.0
    %176 = vmatprep.subr.mxu0 0.0
    %177 = vmatpush1.msra.mxu0 0.0
    %178 = vmatprep.mubr.f32.mxu0 0.0
    %179 = vmatmul.mubr.f32.gmra.mrb[0].mxu0 %v35
    %v180 = vpop.f32.mrb[0].mxu0
    %v181 = vadd.f32 0.0, %v180
    %v182 = vpop.f32.mrb[0].mxu0
    %183 = vdwg.mxu0
    %v185 = vsel %vm33, %v32, 0
    %187 = vmatprep.subr.mxu0 0.0
    %188 = vmatpush1.msra.mxu0 %v12
    %189 = vmatprep.subr.mxu0 0.0
    %190 = vmatpush1.msra.mxu0 %v13
    %191 = vmatprep.subr.mxu0 0.0
    %192 = vmatpush1.msra.mxu0 %v39
    %193 = vmatprep.subr.mxu0 0.0
    %194 = vmatpush1.msra.mxu0 0.0
    %195 = vmatprep.subr.mxu0 0.0
    %196 = vmatpush1.msra.mxu0 0.0
    %197 = vmatprep.subr.mxu0 0.0
    %198 = vmatpush1.msra.mxu0 0.0
    %199 = vmatprep.subr.mxu0 0.0
    %200 = vmatpush1.msra.mxu0 0.0
    %201 = vmatprep.subr.mxu0 0.0
    %202 = vmatpush1.msra.mxu0 0.0
    %203 = vmatprep.subr.mxu0 0.0
    %204 = vmatpush1.msra.mxu0 0.0
    %205 = vmatprep.subr.mxu0 0.0
    %206 = vmatpush1.msra.mxu0 0.0
    %207 = vmatprep.subr.mxu0 0.0
    %208 = vmatpush1.msra.mxu0 0.0
    %209 = vmatprep.subr.mxu0 0.0
    %210 = vmatpush1.msra.mxu0 0.0
    %211 = vmatprep.subr.mxu0 0.0
    %212 = vmatpush1.msra.mxu0 0.0
    %213 = vmatprep.subr.mxu0 0.0
    %214 = vmatpush1.msra.mxu0 0.0
    %215 = vmatprep.subr.mxu0 0.0
    %216 = vmatpush1.msra.mxu0 0.0
    %217 = vmatprep.subr.mxu0 0.0
    %218 = vmatpush1.msra.mxu0 0.0
    %219 = vmatprep.subr.mxu0 0.0
    %220 = vmatpush1.msra.mxu0 0.0
    %221 = vmatprep.subr.mxu0 0.0
    %222 = vmatpush1.msra.mxu0 0.0
    %223 = vmatprep.subr.mxu0 0.0
    %224 = vmatpush1.msra.mxu0 0.0
    %225 = vmatprep.subr.mxu0 0.0
    %226 = vmatpush1.msra.mxu0 0.0
    %227 = vmatprep.subr.mxu0 0.0
    %228 = vmatpush1.msra.mxu0 0.0
    %229 = vmatprep.subr.mxu0 0.0
    %230 = vmatpush1.msra.mxu0 0.0
    %231 = vmatprep.subr.mxu0 0.0
    %232 = vmatpush1.msra.mxu0 0.0
    %233 = vmatprep.subr.mxu0 0.0
    %234 = vmatpush1.msra.mxu0 0.0
    %235 = vmatprep.subr.mxu0 0.0
    %236 = vmatpush1.msra.mxu0 0.0
    %237 = vmatprep.subr.mxu0 0.0
    %238 = vmatpush1.msra.mxu0 0.0
    %239 = vmatprep.subr.mxu0 0.0
    %240 = vmatpush1.msra.mxu0 0.0
    %241 = vmatprep.subr.mxu0 0.0
    %242 = vmatpush1.msra.mxu0 0.0
    %243 = vmatprep.subr.mxu0 0.0
    %244 = vmatpush1.msra.mxu0 0.0
    %245 = vmatprep.subr.mxu0 0.0
    %246 = vmatpush1.msra.mxu0 0.0
    %247 = vmatprep.subr.mxu0 0.0
    %248 = vmatpush1.msra.mxu0 0.0
    %249 = vmatprep.subr.mxu0 0.0
    %250 = vmatpush1.msra.mxu0 0.0
    %251 = vmatprep.mubr.f32.mxu0 0.0
    %252 = vmatmul.mubr.f32.gmra.mrb[0].mxu0 %v185
    %v253 = vpop.f32.mrb[0].mxu0
    %v254 = vadd.f32 0.0, %v253
    %v255 = vpop.f32.mrb[0].mxu0
    %256 = vdwg.mxu0
    %257 = vmatprep.subr.mxu0 0.0
    %258 = vmatpush1.msra.mxu0 %v15
    %259 = vmatprep.subr.mxu0 0.0
    %260 = vmatpush1.msra.mxu0 %v16
    %261 = vmatprep.subr.mxu0 0.0
    %262 = vmatpush1.msra.mxu0 %v112
    %263 = vmatprep.subr.mxu0 0.0
    %264 = vmatpush1.msra.mxu0 0.0
    %265 = vmatprep.subr.mxu0 0.0
    %266 = vmatpush1.msra.mxu0 0.0
    %267 = vmatprep.subr.mxu0 0.0
    %268 = vmatpush1.msra.mxu0 0.0
    %269 = vmatprep.subr.mxu0 0.0
    %270 = vmatpush1.msra.mxu0 0.0
    %271 = vmatprep.subr.mxu0 0.0
    %272 = vmatpush1.msra.mxu0 0.0
    %273 = vmatprep.subr.mxu0 0.0
    %274 = vmatpush1.msra.mxu0 0.0
    %275 = vmatprep.subr.mxu0 0.0
    %276 = vmatpush1.msra.mxu0 0.0
    %277 = vmatprep.subr.mxu0 0.0
    %278 = vmatpush1.msra.mxu0 0.0
    %279 = vmatprep.subr.mxu0 0.0
    %280 = vmatpush1.msra.mxu0 0.0
    %281 = vmatprep.subr.mxu0 0.0
    %282 = vmatpush1.msra.mxu0 0.0
    %283 = vmatprep.subr.mxu0 0.0
    %284 = vmatpush1.msra.mxu0 0.0
    %285 = vmatprep.subr.mxu0 0.0
    %286 = vmatpush1.msra.mxu0 0.0
    %287 = vmatprep.subr.mxu0 0.0
    %288 = vmatpush1.msra.mxu0 0.0
    %289 = vmatprep.subr.mxu0 0.0
    %290 = vmatpush1.msra.mxu0 0.0
    %291 = vmatprep.subr.mxu0 0.0
    %292 = vmatpush1.msra.mxu0 0.0
    %293 = vmatprep.subr.mxu0 0.0
    %294 = vmatpush1.msra.mxu0 0.0
    %295 = vmatprep.subr.mxu0 0.0
    %296 = vmatpush1.msra.mxu0 0.0
    %297 = vmatprep.subr.mxu0 0.0
    %298 = vmatpush1.msra.mxu0 0.0
    %299 = vmatprep.subr.mxu0 0.0
    %300 = vmatpush1.msra.mxu0 0.0
    %301 = vmatprep.subr.mxu0 0.0
    %302 = vmatpush1.msra.mxu0 0.0
    %303 = vmatprep.subr.mxu0 0.0
    %304 = vmatpush1.msra.mxu0 0.0
    %305 = vmatprep.subr.mxu0 0.0
    %306 = vmatpush1.msra.mxu0 0.0
    %307 = vmatprep.subr.mxu0 0.0
    %308 = vmatpush1.msra.mxu0 0.0
    %309 = vmatprep.subr.mxu0 0.0
    %310 = vmatpush1.msra.mxu0 0.0
    %311 = vmatprep.subr.mxu0 0.0
    %312 = vmatpush1.msra.mxu0 0.0
    %313 = vmatprep.subr.mxu0 0.0
    %314 = vmatpush1.msra.mxu0 0.0
    %315 = vmatprep.subr.mxu0 0.0
    %316 = vmatpush1.msra.mxu0 0.0
    %317 = vmatprep.subr.mxu0 0.0
    %318 = vmatpush1.msra.mxu0 0.0
    %319 = vmatprep.subr.mxu0 0.0
    %320 = vmatpush1.msra.mxu0 0.0
    %321 = vmatprep.mubr.f32.mxu0 0.0
    %322 = vmatmul.mubr.f32.gmra.mrb[0].mxu0 %v185
    %v323 = vpop.f32.mrb[0].mxu0
    %v324 = vadd.f32 0.0, %v323
    %v325 = vpop.f32.mrb[0].mxu0
    %326 = vdwg.mxu0
    %v327 = vmul.f32 %v108, %v108
    %v328 = vmul.f32 %v181, %v181
    %vm329 = vcmask 261120
    %v330 = vsel %vm329, %v327, 0.0
    %331 = vadd.xlane.f32.xlu0 %v330
    %v332 = vpop.xlane.xlu0 %331
    %v333 = vsel %vm329, %v328, 0.0
    %334 = vadd.xlane.f32.xlu0 %v333
    %v335 = vpop.xlane.xlu0 %334
    %v336 = vrsqrt.pop %v332
    %v337 = vrsqrt.pop %v335
    %v338 = vmul.f32 %v108, %v336
    %v339 = vmul.f32 %v181, %v337
    %v340 = vmul.f32 %v254, %v254
    %v341 = vmul.f32 %v324, %v324
    %v342 = vsel %vm329, %v340, 0.0
    %343 = vadd.xlane.f32.xlu0 %v342
    %v344 = vpop.xlane.xlu0 %343
    %v345 = vsel %vm329, %v341, 0.0
    %346 = vadd.xlane.f32.xlu0 %v345
    %v347 = vpop.xlane.xlu0 %346
    %v348 = vrsqrt.pop %v344
    %v349 = vrsqrt.pop %v347
    %v350 = vmul.f32 %v254, %v348
    %v351 = vmul.f32 %v324, %v349
    %v353 = vsel %vm329, %v338, 0
    %v356 = vsel %vm329, %v350, 0
    %358 = vmatprep.subr.mxu0 0.0
    %359 = vmatpush1.xpose.msra.mxu0 %v356
    %360 = vmatprep.subr.mxu0 0.0
    %361 = vmatpush1.xpose.msra.mxu0 0.0
    %362 = vmatprep.subr.mxu0 0.0
    %363 = vmatpush1.xpose.msra.mxu0 0.0
    %364 = vmatprep.subr.mxu0 0.0
    %365 = vmatpush1.xpose.msra.mxu0 0.0
    %366 = vmatprep.subr.mxu0 0.0
    %367 = vmatpush1.xpose.msra.mxu0 0.0
    %368 = vmatprep.subr.mxu0 0.0
    %369 = vmatpush1.xpose.msra.mxu0 0.0
    %370 = vmatprep.subr.mxu0 0.0
    %371 = vmatpush1.xpose.msra.mxu0 0.0
    %372 = vmatprep.subr.mxu0 0.0
    %373 = vmatpush1.xpose.msra.mxu0 0.0
    %374 = vmatprep.subr.mxu0 0.0
    %375 = vmatpush1.xpose.msra.mxu0 0.0
    %376 = vmatprep.subr.mxu0 0.0
    %377 = vmatpush1.xpose.msra.mxu0 0.0
    %378 = vmatprep.subr.mxu0 0.0
    %379 = vmatpush1.xpose.msra.mxu0 0.0
    %380 = vmatprep.subr.mxu0 0.0
    %381 = vmatpush1.xpose.msra.mxu0 0.0
    %382 = vmatprep.subr.mxu0 0.0
    %383 = vmatpush1.xpose.msra.mxu0 0.0
    %384 = vmatprep.subr.mxu0 0.0
    %385 = vmatpush1.xpose.msra.mxu0 0.0
    %386 = vmatprep.subr.mxu0 0.0
    %387 = vmatpush1.xpose.msra.mxu0 0.0
    %388 = vmatprep.subr.mxu0 0.0
    %389 = vmatpush1.xpose.msra.mxu0 0.0
    %390 = vmatprep.subr.mxu0 0.0
    %391 = vmatpush1.xpose.msra.mxu0 0.0
    %392 = vmatprep.subr.mxu0 0.0
    %393 = vmatpush1.xpose.msra.mxu0 0.0
    %394 = vmatprep.subr.mxu0 0.0
    %395 = vmatpush1.xpose.msra.mxu0 0.0
    %396 = vmatprep.subr.mxu0 0.0
    %397 = vmatpush1.xpose.msra.mxu0 0.0
    %398 = vmatprep.subr.mxu0 0.0
    %399 = vmatpush1.xpose.msra.mxu0 0.0
    %400 = vmatprep.subr.mxu0 0.0
    %401 = vmatpush1.xpose.msra.mxu0 0.0
    %402 = vmatprep.subr.mxu0 0.0
    %403 = vmatpush1.xpose.msra.mxu0 0.0
    %404 = vmatprep.subr.mxu0 0.0
    %405 = vmatpush1.xpose.msra.mxu0 0.0
    %406 = vmatprep.subr.mxu0 0.0
    %407 = vmatpush1.xpose.msra.mxu0 0.0
    %408 = vmatprep.subr.mxu0 0.0
    %409 = vmatpush1.xpose.msra.mxu0 0.0
    %410 = vmatprep.subr.mxu0 0.0
    %411 = vmatpush1.xpose.msra.mxu0 0.0
    %412 = vmatprep.subr.mxu0 0.0
    %413 = vmatpush1.xpose.msra.mxu0 0.0
    %414 = vmatprep.subr.mxu0 0.0
    %415 = vmatpush1.xpose.msra.mxu0 0.0
    %416 = vmatprep.subr.mxu0 0.0
    %417 = vmatpush1.xpose.msra.mxu0 0.0
    %418 = vmatprep.subr.mxu0 0.0
    %419 = vmatpush1.xpose.msra.mxu0 0.0
    %420 = vmatprep.subr.mxu0 0.0
    %421 = vmatpush1.xpose.msra.mxu0 0.0
    %422 = vmatprep.mubr.f32.mxu0 0.0
    %423 = vmatmul.mubr.f32.gmra.mrb[0].mxu0 %v353
    %v424 = vpop.f32.mrb[0].mxu0
    %v425 = vadd.f32 0.0, %v424
    %v426 = vpop.f32.mrb[0].mxu0
    %427 = vdwg.mxu0
    %v429 = vsel %vm329, %v339, 0
    %v432 = vsel %vm329, %v351, 0
    %434 = vmatprep.subr.mxu0 0.0
    %435 = vmatpush1.xpose.msra.mxu0 %v432
    %436 = vmatprep.subr.mxu0 0.0
    %437 = vmatpush1.xpose.msra.mxu0 0.0
    %438 = vmatprep.subr.mxu0 0.0
    %439 = vmatpush1.xpose.msra.mxu0 0.0
    %440 = vmatprep.subr.mxu0 0.0
    %441 = vmatpush1.xpose.msra.mxu0 0.0
    %442 = vmatprep.subr.mxu0 0.0
    %443 = vmatpush1.xpose.msra.mxu0 0.0
    %444 = vmatprep.subr.mxu0 0.0
    %445 = vmatpush1.xpose.msra.mxu0 0.0
    %446 = vmatprep.subr.mxu0 0.0
    %447 = vmatpush1.xpose.msra.mxu0 0.0
    %448 = vmatprep.subr.mxu0 0.0
    %449 = vmatpush1.xpose.msra.mxu0 0.0
    %450 = vmatprep.subr.mxu0 0.0
    %451 = vmatpush1.xpose.msra.mxu0 0.0
    %452 = vmatprep.subr.mxu0 0.0
    %453 = vmatpush1.xpose.msra.mxu0 0.0
    %454 = vmatprep.subr.mxu0 0.0
    %455 = vmatpush1.xpose.msra.mxu0 0.0
    %456 = vmatprep.subr.mxu0 0.0
    %457 = vmatpush1.xpose.msra.mxu0 0.0
    %458 = vmatprep.subr.mxu0 0.0
    %459 = vmatpush1.xpose.msra.mxu0 0.0
    %460 = vmatprep.subr.mxu0 0.0
    %461 = vmatpush1.xpose.msra.mxu0 0.0
    %462 = vmatprep.subr.mxu0 0.0
    %463 = vmatpush1.xpose.msra.mxu0 0.0
    %464 = vmatprep.subr.mxu0 0.0
    %465 = vmatpush1.xpose.msra.mxu0 0.0
    %466 = vmatprep.subr.mxu0 0.0
    %467 = vmatpush1.xpose.msra.mxu0 0.0
    %468 = vmatprep.subr.mxu0 0.0
    %469 = vmatpush1.xpose.msra.mxu0 0.0
    %470 = vmatprep.subr.mxu0 0.0
    %471 = vmatpush1.xpose.msra.mxu0 0.0
    %472 = vmatprep.subr.mxu0 0.0
    %473 = vmatpush1.xpose.msra.mxu0 0.0
    %474 = vmatprep.subr.mxu0 0.0
    %475 = vmatpush1.xpose.msra.mxu0 0.0
    %476 = vmatprep.subr.mxu0 0.0
    %477 = vmatpush1.xpose.msra.mxu0 0.0
    %478 = vmatprep.subr.mxu0 0.0
    %479 = vmatpush1.xpose.msra.mxu0 0.0
    %480 = vmatprep.subr.mxu0 0.0
    %481 = vmatpush1.xpose.msra.mxu0 0.0
    %482 = vmatprep.subr.mxu0 0.0
    %483 = vmatpush1.xpose.msra.mxu0 0.0
    %484 = vmatprep.subr.mxu0 0.0
    %485 = vmatpush1.xpose.msra.mxu0 0.0
    %486 = vmatprep.subr.mxu0 0.0
    %487 = vmatpush1.xpose.msra.mxu0 0.0
    %488 = vmatprep.subr.mxu0 0.0
    %489 = vmatpush1.xpose.msra.mxu0 0.0
    %490 = vmatprep.subr.mxu0 0.0
    %491 = vmatpush1.xpose.msra.mxu0 0.0
    %492 = vmatprep.subr.mxu0 0.0
    %493 = vmatpush1.xpose.msra.mxu0 0.0
    %494 = vmatprep.subr.mxu0 0.0
    %495 = vmatpush1.xpose.msra.mxu0 0.0
    %496 = vmatprep.subr.mxu0 0.0
    %497 = vmatpush1.xpose.msra.mxu0 0.0
    %498 = vmatprep.mubr.f32.mxu0 0.0
    %499 = vmatmul.mubr.f32.gmra.mrb[0].mxu0 %v429
    %v500 = vpop.f32.mrb[0].mxu0
    %v501 = vadd.f32 0.0, %v500
    %v502 = vpop.f32.mrb[0].mxu0
    %503 = vdwg.mxu0
    %vm504 = vcmask 64512
    %v505 = vsel %vm504, %v425, -inf
    %506 = vmax.xlane.f32.xlu0 %v505
    %v507 = vpop.xlane.xlu0 %506
    %v508 = vsel %vm504, %v501, -inf
    %509 = vmax.xlane.f32.xlu0 %v508
    %v510 = vpop.xlane.xlu0 %509
    %vm511 = vcmp.eq.f32.partialorder %v425, %v507
    %vm512 = vcmp.eq.f32.partialorder %v501, %v510
    %v513 = vsel %vm511, %v21, 1073741824
    %v514 = vsel %vm512, %v21, 1073741824
    %v515 = vsel %vm504, %v513, 2147483647
    %v516 = vand.u32 %v515, 65535
    %v517 = vshra.s32 %v515, 16
    %v518 = vcvt.s32.f32 %v516
    %v519 = vcvt.s32.f32 %v517
    %520 = vmin.xlane.f32.xlu0 %v519
    %v521 = vpop.xlane.xlu0 %520
    %vm522 = vcmp.eq.f32.partialorder %v519, %v521
    %v523 = vsel %vm522, %v518, inf
    %524 = vmin.xlane.f32.xlu0 %v523
    %v525 = vpop.xlane.xlu0 %524
    %v526 = vcvt.f32.s32 %v525
    %v527 = vcvt.f32.s32 %v521
    %v528 = vshll.u32 %v527, 16
    %v529 = vadd.s32 %v528, %v526
    %v530 = vsel %vm504, %v514, 2147483647
    %v531 = vand.u32 %v530, 65535
    %v532 = vshra.s32 %v530, 16
    %v533 = vcvt.s32.f32 %v531
    %v534 = vcvt.s32.f32 %v532
    %535 = vmin.xlane.f32.xlu0 %v534
    %v536 = vpop.xlane.xlu0 %535
    %vm537 = vcmp.eq.f32.partialorder %v534, %v536
    %v538 = vsel %vm537, %v533, inf
    %539 = vmin.xlane.f32.xlu0 %v538
    %v540 = vpop.xlane.xlu0 %539
    %v541 = vcvt.f32.s32 %v540
    %v542 = vcvt.f32.s32 %v536
    %v543 = vshll.u32 %v542, 16
    %v544 = vadd.s32 %v543, %v541
    %v547 = vlaneseq
    %v548 = vshrl.u32 %v547, 7
    %v549 = vsub.s32 %v21, %v548
    %v550 = vrot.slane %v507, %v549
    %v551 = vlaneseq
    %v552 = vshrl.u32 %v551, 7
    %v553 = vsub.s32 %v21, %v552
    %v554 = vrot.slane %v510, %v553
    %vm555 = vcmask 1041409
    %v556 = vsel %vm555, %v554, %v550
    %vm558 = vcmask 58368
    %559 = vst.msk [vmem:[#allocation2] sm:$0x3] %vm558, %v556
    %v560 = vlaneseq
    %v561 = vshrl.u32 %v560, 7
    %v562 = vsub.s32 %v21, %v561
    %v563 = vrot.slane %v529, %v562
    %v564 = vlaneseq
    %v565 = vshrl.u32 %v564, 7
    %v566 = vsub.s32 %v21, %v565
    %v567 = vrot.slane %v544, %v566
    %v568 = vsel %vm555, %v567, %v563
    %569 = vst.msk [vmem:[#allocation4] sm:$0x3] %vm558, %v568
    // Predicated region
    $region6: #{tpu_custom_call.1} parent=1 // pred_check
      _
    $region7: #{tpu_custom_call.1} parent=1 // pred_check_branch
      %571 = sbr.rel (0) target = $region9
    $region8: #{tpu_custom_call.1} parent=1 // pred_region
      %s573 = ssub.s32 32, 32
      %574 = vsyncadd [#allocation3], %s573
      %s576 = sshll.u32 [#allocation2], 4
      %s577 = int_to_ptr.vmem [resolvable:$true] %s576
      %579 = dma.vmem_to_hbm [thread:$0]  %s577, 32, %s1, [#allocation3]
    $region9: #{tpu_custom_call.1} parent=1 // pred_fallthru
      _
    // Predicated region
    $region10: #{tpu_custom_call.1} parent=1 // pred_check
      _
    $region11: #{tpu_custom_call.1} parent=1 // pred_check_branch
      %581 = sbr.rel (0) target = $region13
    $region12: #{tpu_custom_call.1} parent=1 // pred_region
      %s583 = ssub.s32 32, 32
      %584 = vsyncadd [#allocation5], %s583
      %s586 = sshll.u32 [#allocation4], 4
      %s587 = int_to_ptr.vmem [resolvable:$true] %s586
      %589 = dma.vmem_to_hbm [thread:$0]  %s587, 32, %s2, [#allocation5]
    $region13: #{tpu_custom_call.1} parent=1 // pred_fallthru
      _
    // Predicated region
    $region14: #{tpu_custom_call.1} parent=1 // pred_check
      _
    $region15: #{tpu_custom_call.1} parent=1 // pred_check_branch
      %591 = sbr.rel (0) target = $region17
    $region16: #{tpu_custom_call.1} parent=1 // pred_region
      %592 = dma.done [#allocation3], 32
    $region17: #{tpu_custom_call.1} parent=1 // pred_fallthru
      _
    // Predicated region
    $region18: #{tpu_custom_call.1} parent=1 // pred_check
      _
    $region19: #{tpu_custom_call.1} parent=1 // pred_check_branch
      %594 = sbr.rel (0) target = $region21
    $region20: #{tpu_custom_call.1} parent=1 // pred_region
      %595 = dma.done [#allocation5], 32
    $region21: #{tpu_custom_call.1} parent=1 // pred_fallthru
      _
    %596 = vsyncpa [#allocation3], 1
    %597 = vsyncpa [#allocation5], 1

</llo_original>
